<compile_context>
chip_gen: v6e
topology: v6e:2x2x1
jax: 0.10.0
libtpu: 0.0.40
codegen_flags: <defaults>
</compile_context>

<pallas_src>
import functools

import jax
import jax.numpy as jnp
from jax import lax
from jax.experimental import pallas as pl
from jax.experimental.pallas import tpu as pltpu


def _pearson_kernel(x_ref, y_ref, o_ref,
                    sx_ref, sy_ref, sxx_ref, syy_ref, sxy_ref,
                    *, inv_count, inv_b):
    """Grid axis 0 iterates over B tiles (reduction axis, 'arbitrary')."""
    b = pl.program_id(0)

    @pl.when(b == 0)
    def _init():
        sx_ref[...] = jnp.zeros_like(sx_ref)
        sy_ref[...] = jnp.zeros_like(sy_ref)
        sxx_ref[...] = jnp.zeros_like(sxx_ref)
        syy_ref[...] = jnp.zeros_like(syy_ref)
        sxy_ref[...] = jnp.zeros_like(sxy_ref)

    # Load the native-dtype tile; accumulate in f32 (no-op cast for f32 inputs).
    x = x_ref[...].astype(jnp.float32)
    y = y_ref[...].astype(jnp.float32)

    # Per-column (per-lane) partial sums over the B tile: pure sublane
    # reductions + VPU adds, hidden under the input DMA.
    sx_ref[...] += jnp.sum(x, axis=0, keepdims=True)
    sy_ref[...] += jnp.sum(y, axis=0, keepdims=True)
    sxx_ref[...] += jnp.sum(x * x, axis=0, keepdims=True)
    syy_ref[...] += jnp.sum(y * y, axis=0, keepdims=True)
    sxy_ref[...] += jnp.sum(x * y, axis=0, keepdims=True)

    @pl.when(b == pl.num_programs(0) - 1)
    def _finalize():
        # Global scalars: single cross-lane reduction in the epilogue.
        s_x = jnp.sum(sx_ref[...])
        s_y = jnp.sum(sy_ref[...])
        s_xx = jnp.sum(sxx_ref[...])
        s_yy = jnp.sum(syy_ref[...])

        mx = s_x * inv_count                     # mean(x) over all elements
        my = s_y * inv_count                     # mean(y)
        var_x = s_xx * inv_count - mx * mx       # mean((x - mx)^2)
        var_y = s_yy * inv_count - my * my       # mean((y - my)^2)

        # 1 / (x_n_norm * y_n_norm) via a single EUP rsqrt.
        inv_norm = lax.rsqrt(var_x * var_y)

        # mean_B((x-mx)(y-my))[j] = sxy[j]/B - mx*sy[j]/B - my*sx[j]/B + mx*my
        cov_col = (sxy_ref[...] - mx * sy_ref[...] - my * sx_ref[...]) * inv_b \
                  + mx * my

        o_ref[...] = (-cov_col * inv_norm).astype(o_ref.dtype)


def _pick_block_b(n_cols: int, itemsize: int = 4,
                  tile_budget_bytes: int = 2 << 20) -> int:
    # ~2 MiB per input tile -> with 2 inputs x 2 pipeline buffers that's ~8 MiB
    # of VMEM, comfortably inside the default scoped limit on v5e/v6e/v7x.
    tb = tile_budget_bytes // max(1, n_cols * itemsize)
    tb = int(tb) - int(tb) % 8
    return max(8, min(tb, 2048))


def pearson_correlation(x: jax.Array, y: jax.Array, *, block_b: int | None = None
                        ) -> jax.Array:
    """x, y: (B, N) float arrays. Returns the (N,) PearsonCorrelation output."""
    assert x.shape == y.shape and x.ndim == 2, "expected matching (B, N) inputs"
    B, N = x.shape

    if block_b is None:
        block_b = _pick_block_b(N)

    if B <= block_b:
        tb = B                       # full-dim block: no (8,) divisibility needed
        b_pad = B
    else:
        tb = max(8, block_b - block_b % 8)
        b_pad = ((B + tb - 1) // tb) * tb
        if b_pad != B:
            # Zero rows add nothing to any sum; means use the true counts below.
            pad = b_pad - B
            x = jnp.pad(x, ((0, pad), (0, 0)))
            y = jnp.pad(y, ((0, pad), (0, 0)))

    kernel = functools.partial(
        _pearson_kernel,
        inv_count=1.0 / float(B * N),   # true element count
        inv_b=1.0 / float(B),           # true batch size
    )

    cost = pl.CostEstimate(
        flops=10 * B * N,
        transcendentals=2,
        bytes_accessed=8 * B * N + 4 * N,
    )

    out = pl.pallas_call(
        kernel,
        out_shape=jax.ShapeDtypeStruct((1, N), jnp.float32),
        grid_spec=pltpu.PrefetchScalarGridSpec(
            num_scalar_prefetch=0,
            grid=(b_pad // tb,),
            in_specs=[
                pl.BlockSpec((tb, N), lambda b: (b, 0)),
                pl.BlockSpec((tb, N), lambda b: (b, 0)),
            ],
            out_specs=pl.BlockSpec((1, N), lambda b: (0, 0)),
            scratch_shapes=[pltpu.VMEM((1, N), jnp.float32)] * 5,
        ),
        compiler_params=pltpu.CompilerParams(
            dimension_semantics=("arbitrary",),   # B axis is a reduction
        ),
        cost_estimate=cost,
    )(x, y)
    return out.reshape(N)


def _reference(x, y):
    x = x.astype(jnp.float32)
    y = y.astype(jnp.float32)
    x_n = x - jnp.mean(x)
    y_n = y - jnp.mean(y)
    x_n_norm = jnp.sqrt(jnp.mean(x_n ** 2))
    y_n_norm = jnp.sqrt(jnp.mean(y_n ** 2))
    normaliser = x_n_norm * y_n_norm
    return -jnp.mean(x_n * y_n, axis=0) / normaliser


if __name__ == "__main__":
    key = jax.random.PRNGKey(0)
    k1, k2, k3, k4 = jax.random.split(key, 4)

    # Test 1: small shape (single B tile).
    B, N = 64, 128
    x = jax.random.normal(k1, (B, N), dtype=jnp.float32)
    y = 0.5 * x + 0.5 * jax.random.normal(k2, (B, N), dtype=jnp.float32)
    out = jax.block_until_ready(pearson_correlation(x, y))
    ref = _reference(x, y)
    assert out.shape == (N,)
    assert jnp.allclose(out, ref, atol=1e-4, rtol=1e-4), (
        f"test1 mismatch: max abs err = {jnp.max(jnp.abs(out - ref))}"
    )

    # Test 2: B not a multiple of the tile -> exercises zero-padding and the
    # multi-step pipelined reduction over B.
    B2, N2 = 1000, 256
    x2 = jax.random.normal(k3, (B2, N2), dtype=jnp.float32)
    y2 = 0.5 * x2 + 0.5 * jax.random.normal(k4, (B2, N2), dtype=jnp.float32)
    out2 = jax.block_until_ready(pearson_correlation(x2, y2, block_b=256))
    ref2 = _reference(x2, y2)
    assert out2.shape == (N2,)
    assert jnp.allclose(out2, ref2, atol=1e-4, rtol=1e-4), (
        f"test2 mismatch: max abs err = {jnp.max(jnp.abs(out2 - ref2))}"
    )

    print("KERNEL_OK")
</pallas_src>

<mosaic_0001>
module attributes {stable_mosaic.version = 11 : i64} {
  func.func @_pearson_kernel(%arg0: i32, %arg1: memref<64x128xf32, #tpu.memory_space<vmem>>, %arg2: memref<64x128xf32, #tpu.memory_space<vmem>>, %arg3: memref<1x128xf32, #tpu.memory_space<vmem>>, %arg4: memref<1x128xf32, #tpu.memory_space<vmem>>, %arg5: memref<1x128xf32, #tpu.memory_space<vmem>>, %arg6: memref<1x128xf32, #tpu.memory_space<vmem>>, %arg7: memref<1x128xf32, #tpu.memory_space<vmem>>, %arg8: memref<1x128xf32, #tpu.memory_space<vmem>>) attributes {dimension_semantics = [#tpu.dimension_semantics<arbitrary>], iteration_bounds = array<i64: 1>, scalar_prefetch = 0 : i64, scratch_operands = 5 : i64, tpu.core_type = #tpu.core_type<tc>, window_params = [{transform_indices = @transform_0, window_bounds = array<i64: 64, 128>}, {transform_indices = @transform_1, window_bounds = array<i64: 64, 128>}, {pipeline_mode = #tpu.pipeline_mode<synchronous>, transform_indices = @transform_2, window_bounds = array<i64: 1, 128>}]} {
    %c0_i32 = arith.constant 0 : i32
    %0 = arith.cmpi eq, %arg0, %c0_i32 : i32
    %1 = arith.extui %0 : i1 to i32
    %c0_i32_0 = arith.constant 0 : i32
    %2 = arith.cmpi ne, %1, %c0_i32_0 : i32
    scf.if %2 {
      %cst_30 = arith.constant 0.000000e+00 : f32
      %36 = vector.broadcast %cst_30 : f32 to vector<1x128xf32>
      %c0_31 = arith.constant 0 : index
      %c0_32 = arith.constant 0 : index
      %37 = vector.load %arg4[%c0_31, %c0_32] : memref<1x128xf32, #tpu.memory_space<vmem>>, vector<1x128xf32>
      tpu.vector_store %arg4[%c0_31, %c0_32], %36 {strides = array<i32>} : memref<1x128xf32, #tpu.memory_space<vmem>>, vector<1x128xf32>,
      %cst_33 = arith.constant 0.000000e+00 : f32
      %38 = vector.broadcast %cst_33 : f32 to vector<1x128xf32>
      %c0_34 = arith.constant 0 : index
      %c0_35 = arith.constant 0 : index
      %39 = vector.load %arg5[%c0_34, %c0_35] : memref<1x128xf32, #tpu.memory_space<vmem>>, vector<1x128xf32>
      tpu.vector_store %arg5[%c0_34, %c0_35], %38 {strides = array<i32>} : memref<1x128xf32, #tpu.memory_space<vmem>>, vector<1x128xf32>,
      %cst_36 = arith.constant 0.000000e+00 : f32
      %40 = vector.broadcast %cst_36 : f32 to vector<1x128xf32>
      %c0_37 = arith.constant 0 : index
      %c0_38 = arith.constant 0 : index
      %41 = vector.load %arg6[%c0_37, %c0_38] : memref<1x128xf32, #tpu.memory_space<vmem>>, vector<1x128xf32>
      tpu.vector_store %arg6[%c0_37, %c0_38], %40 {strides = array<i32>} : memref<1x128xf32, #tpu.memory_space<vmem>>, vector<1x128xf32>,
      %cst_39 = arith.constant 0.000000e+00 : f32
      %42 = vector.broadcast %cst_39 : f32 to vector<1x128xf32>
      %c0_40 = arith.constant 0 : index
      %c0_41 = arith.constant 0 : index
      %43 = vector.load %arg7[%c0_40, %c0_41] : memref<1x128xf32, #tpu.memory_space<vmem>>, vector<1x128xf32>
      tpu.vector_store %arg7[%c0_40, %c0_41], %42 {strides = array<i32>} : memref<1x128xf32, #tpu.memory_space<vmem>>, vector<1x128xf32>,
      %cst_42 = arith.constant 0.000000e+00 : f32
      %44 = vector.broadcast %cst_42 : f32 to vector<1x128xf32>
      %c0_43 = arith.constant 0 : index
      %c0_44 = arith.constant 0 : index
      %45 = vector.load %arg8[%c0_43, %c0_44] : memref<1x128xf32, #tpu.memory_space<vmem>>, vector<1x128xf32>
      tpu.vector_store %arg8[%c0_43, %c0_44], %44 {strides = array<i32>} : memref<1x128xf32, #tpu.memory_space<vmem>>, vector<1x128xf32>,
    } else {
    }
    %c0 = arith.constant 0 : index
    %c0_1 = arith.constant 0 : index
    %3 = vector.load %arg1[%c0, %c0_1] : memref<64x128xf32, #tpu.memory_space<vmem>>, vector<64x128xf32>
    %c0_2 = arith.constant 0 : index
    %c0_3 = arith.constant 0 : index
    %4 = vector.load %arg2[%c0_2, %c0_3] : memref<64x128xf32, #tpu.memory_space<vmem>>, vector<64x128xf32>
    %c0_4 = arith.constant 0 : index
    %c0_5 = arith.constant 0 : index
    %5 = vector.load %arg4[%c0_4, %c0_5] : memref<1x128xf32, #tpu.memory_space<vmem>>, vector<1x128xf32>
    %cst = arith.constant dense<0.000000e+00> : vector<128xf32>
    %6 = vector.multi_reduction <add>, %3, %cst [0] : vector<64x128xf32> to vector<128xf32>
    %7 = vector.shape_cast %6 : vector<128xf32> to vector<1x128xf32>
    %8 = arith.addf %5, %7 : vector<1x128xf32>
    %c0_6 = arith.constant 0 : index
    %c0_7 = arith.constant 0 : index
    %9 = vector.load %arg4[%c0_6, %c0_7] : memref<1x128xf32, #tpu.memory_space<vmem>>, vector<1x128xf32>
    tpu.vector_store %arg4[%c0_6, %c0_7], %8 {strides = array<i32>} : memref<1x128xf32, #tpu.memory_space<vmem>>, vector<1x128xf32>,
    %c0_8 = arith.constant 0 : index
    %c0_9 = arith.constant 0 : index
    %10 = vector.load %arg5[%c0_8, %c0_9] : memref<1x128xf32, #tpu.memory_space<vmem>>, vector<1x128xf32>
    %cst_10 = arith.constant dense<0.000000e+00> : vector<128xf32>
    %11 = vector.multi_reduction <add>, %4, %cst_10 [0] : vector<64x128xf32> to vector<128xf32>
    %12 = vector.shape_cast %11 : vector<128xf32> to vector<1x128xf32>
    %13 = arith.addf %10, %12 : vector<1x128xf32>
    %c0_11 = arith.constant 0 : index
    %c0_12 = arith.constant 0 : index
    %14 = vector.load %arg5[%c0_11, %c0_12] : memref<1x128xf32, #tpu.memory_space<vmem>>, vector<1x128xf32>
    tpu.vector_store %arg5[%c0_11, %c0_12], %13 {strides = array<i32>} : memref<1x128xf32, #tpu.memory_space<vmem>>, vector<1x128xf32>,
    %c0_13 = arith.constant 0 : index
    %c0_14 = arith.constant 0 : index
    %15 = vector.load %arg6[%c0_13, %c0_14] : memref<1x128xf32, #tpu.memory_space<vmem>>, vector<1x128xf32>
    %16 = arith.mulf %3, %3 : vector<64x128xf32>
    %cst_15 = arith.constant dense<0.000000e+00> : vector<128xf32>
    %17 = vector.multi_reduction <add>, %16, %cst_15 [0] : vector<64x128xf32> to vector<128xf32>
    %18 = vector.shape_cast %17 : vector<128xf32> to vector<1x128xf32>
    %19 = arith.addf %15, %18 : vector<1x128xf32>
    %c0_16 = arith.constant 0 : index
    %c0_17 = arith.constant 0 : index
    %20 = vector.load %arg6[%c0_16, %c0_17] : memref<1x128xf32, #tpu.memory_space<vmem>>, vector<1x128xf32>
    tpu.vector_store %arg6[%c0_16, %c0_17], %19 {strides = array<i32>} : memref<1x128xf32, #tpu.memory_space<vmem>>, vector<1x128xf32>,
    %c0_18 = arith.constant 0 : index
    %c0_19 = arith.constant 0 : index
    %21 = vector.load %arg7[%c0_18, %c0_19] : memref<1x128xf32, #tpu.memory_space<vmem>>, vector<1x128xf32>
    %22 = arith.mulf %4, %4 : vector<64x128xf32>
    %cst_20 = arith.constant dense<0.000000e+00> : vector<128xf32>
    %23 = vector.multi_reduction <add>, %22, %cst_20 [0] : vector<64x128xf32> to vector<128xf32>
    %24 = vector.shape_cast %23 : vector<128xf32> to vector<1x128xf32>
    %25 = arith.addf %21, %24 : vector<1x128xf32>
    %c0_21 = arith.constant 0 : index
    %c0_22 = arith.constant 0 : index
    %26 = vector.load %arg7[%c0_21, %c0_22] : memref<1x128xf32, #tpu.memory_space<vmem>>, vector<1x128xf32>
    tpu.vector_store %arg7[%c0_21, %c0_22], %25 {strides = array<i32>} : memref<1x128xf32, #tpu.memory_space<vmem>>, vector<1x128xf32>,
    %c0_23 = arith.constant 0 : index
    %c0_24 = arith.constant 0 : index
    %27 = vector.load %arg8[%c0_23, %c0_24] : memref<1x128xf32, #tpu.memory_space<vmem>>, vector<1x128xf32>
    %28 = arith.mulf %3, %4 : vector<64x128xf32>
    %cst_25 = arith.constant dense<0.000000e+00> : vector<128xf32>
    %29 = vector.multi_reduction <add>, %28, %cst_25 [0] : vector<64x128xf32> to vector<128xf32>
    %30 = vector.shape_cast %29 : vector<128xf32> to vector<1x128xf32>
    %31 = arith.addf %27, %30 : vector<1x128xf32>
    %c0_26 = arith.constant 0 : index
    %c0_27 = arith.constant 0 : index
    %32 = vector.load %arg8[%c0_26, %c0_27] : memref<1x128xf32, #tpu.memory_space<vmem>>, vector<1x128xf32>
    tpu.vector_store %arg8[%c0_26, %c0_27], %31 {strides = array<i32>} : memref<1x128xf32, #tpu.memory_space<vmem>>, vector<1x128xf32>,
    %c0_i32_28 = arith.constant 0 : i32
    %33 = arith.cmpi eq, %arg0, %c0_i32_28 : i32
    %34 = arith.extui %33 : i1 to i32
    %c0_i32_29 = arith.constant 0 : i32
    %35 = arith.cmpi ne, %34, %c0_i32_29 : i32
    scf.if %35 {
      %c0_30 = arith.constant 0 : index
      %c0_31 = arith.constant 0 : index
      %36 = vector.load %arg4[%c0_30, %c0_31] : memref<1x128xf32, #tpu.memory_space<vmem>>, vector<1x128xf32>
      %37 = vector.shape_cast %36 : vector<1x128xf32> to vector<1x1x128xf32>
      %cst_32 = arith.constant dense<0.000000e+00> : vector<1xf32>
      %38 = vector.multi_reduction <add>, %37, %cst_32 [1, 2] : vector<1x1x128xf32> to vector<1xf32>
      %39 = vector.shape_cast %38 : vector<1xf32> to vector<1x1x1xf32>
      %40 = vector.extract %39[0, 0, 0] : f32 from vector<1x1x1xf32>
      %c0_33 = arith.constant 0 : index
      %c0_34 = arith.constant 0 : index
      %41 = vector.load %arg5[%c0_33, %c0_34] : memref<1x128xf32, #tpu.memory_space<vmem>>, vector<1x128xf32>
      %42 = vector.shape_cast %41 : vector<1x128xf32> to vector<1x1x128xf32>
      %cst_35 = arith.constant dense<0.000000e+00> : vector<1xf32>
      %43 = vector.multi_reduction <add>, %42, %cst_35 [1, 2] : vector<1x1x128xf32> to vector<1xf32>
      %44 = vector.shape_cast %43 : vector<1xf32> to vector<1x1x1xf32>
      %45 = vector.extract %44[0, 0, 0] : f32 from vector<1x1x1xf32>
      %c0_36 = arith.constant 0 : index
      %c0_37 = arith.constant 0 : index
      %46 = vector.load %arg6[%c0_36, %c0_37] : memref<1x128xf32, #tpu.memory_space<vmem>>, vector<1x128xf32>
      %47 = vector.shape_cast %46 : vector<1x128xf32> to vector<1x1x128xf32>
      %cst_38 = arith.constant dense<0.000000e+00> : vector<1xf32>
      %48 = vector.multi_reduction <add>, %47, %cst_38 [1, 2] : vector<1x1x128xf32> to vector<1xf32>
      %49 = vector.shape_cast %48 : vector<1xf32> to vector<1x1x1xf32>
      %50 = vector.extract %49[0, 0, 0] : f32 from vector<1x1x1xf32>
      %c0_39 = arith.constant 0 : index
      %c0_40 = arith.constant 0 : index
      %51 = vector.load %arg7[%c0_39, %c0_40] : memref<1x128xf32, #tpu.memory_space<vmem>>, vector<1x128xf32>
      %52 = vector.shape_cast %51 : vector<1x128xf32> to vector<1x1x128xf32>
      %cst_41 = arith.constant dense<0.000000e+00> : vector<1xf32>
      %53 = vector.multi_reduction <add>, %52, %cst_41 [1, 2] : vector<1x1x128xf32> to vector<1xf32>
      %54 = vector.shape_cast %53 : vector<1xf32> to vector<1x1x1xf32>
      %55 = vector.extract %54[0, 0, 0] : f32 from vector<1x1x1xf32>
      %cst_42 = arith.constant 1.22070313E-4 : f32
      %56 = arith.mulf %40, %cst_42 : f32
      %cst_43 = arith.constant 1.22070313E-4 : f32
      %57 = arith.mulf %45, %cst_43 : f32
      %cst_44 = arith.constant 1.22070313E-4 : f32
      %58 = arith.mulf %50, %cst_44 : f32
      %59 = arith.mulf %56, %56 : f32
      %60 = arith.subf %58, %59 : f32
      %cst_45 = arith.constant 1.22070313E-4 : f32
      %61 = arith.mulf %55, %cst_45 : f32
      %62 = arith.mulf %57, %57 : f32
      %63 = arith.subf %61, %62 : f32
      %64 = arith.mulf %60, %63 : f32
      %65 = math.rsqrt %64 : f32
      %c0_46 = arith.constant 0 : index
      %c0_47 = arith.constant 0 : index
      %66 = vector.load %arg8[%c0_46, %c0_47] : memref<1x128xf32, #tpu.memory_space<vmem>>, vector<1x128xf32>
      %c0_48 = arith.constant 0 : index
      %c0_49 = arith.constant 0 : index
      %67 = vector.load %arg5[%c0_48, %c0_49] : memref<1x128xf32, #tpu.memory_space<vmem>>, vector<1x128xf32>
      %68 = vector.broadcast %56 : f32 to vector<1x128xf32>
      %69 = arith.mulf %68, %67 : vector<1x128xf32>
      %70 = arith.subf %66, %69 : vector<1x128xf32>
      %c0_50 = arith.constant 0 : index
      %c0_51 = arith.constant 0 : index
      %71 = vector.load %arg4[%c0_50, %c0_51] : memref<1x128xf32, #tpu.memory_space<vmem>>, vector<1x128xf32>
      %72 = vector.broadcast %57 : f32 to vector<1x128xf32>
      %73 = arith.mulf %72, %71 : vector<1x128xf32>
      %74 = arith.subf %70, %73 : vector<1x128xf32>
      %cst_52 = arith.constant 1.562500e-02 : f32
      %75 = vector.broadcast %cst_52 : f32 to vector<1x128xf32>
      %76 = arith.mulf %74, %75 : vector<1x128xf32>
      %77 = arith.mulf %56, %57 : f32
      %78 = vector.broadcast %77 : f32 to vector<1x128xf32>
      %79 = arith.addf %76, %78 : vector<1x128xf32>
      %cst_53 = arith.constant 0.000000e+00 : f32
      %80 = vector.broadcast %cst_53 : f32 to vector<1x128xf32>
      %81 = arith.subf %80, %79 : vector<1x128xf32>
      %82 = vector.broadcast %65 : f32 to vector<1x128xf32>
      %83 = arith.mulf %81, %82 : vector<1x128xf32>
      %c0_54 = arith.constant 0 : index
      %c0_55 = arith.constant 0 : index
      %84 = vector.load %arg3[%c0_54, %c0_55] : memref<1x128xf32, #tpu.memory_space<vmem>>, vector<1x128xf32>
      tpu.vector_store %arg3[%c0_54, %c0_55], %83 {strides = array<i32>} : memref<1x128xf32, #tpu.memory_space<vmem>>, vector<1x128xf32>,
    } else {
    }
    return
  }
  func.func @transform_0(%arg0: i32) -> (i32, i32) {
    %c0_i32 = arith.constant 0 : i32
    %c0_i32_0 = arith.constant 0 : i32
    return %arg0, %c0_i32 : i32, i32
  }
  func.func @transform_1(%arg0: i32) -> (i32, i32) {
    %c0_i32 = arith.constant 0 : i32
    %c0_i32_0 = arith.constant 0 : i32
    return %arg0, %c0_i32 : i32, i32
  }
  func.func @transform_2(%arg0: i32) -> (i32, i32) {
    %c0_i32 = arith.constant 0 : i32
    %c0_i32_0 = arith.constant 0 : i32
    %c0_i32_1 = arith.constant 0 : i32
    return %c0_i32, %c0_i32_0 : i32, i32
  }
}

</mosaic_0001>

<llo_original>
// kernel: tpu_custom_call.1
$region0: #{tpu_custom_call.1}
  #allocation0 [shape = 'u32[]', space=smem, size = 0x4, offset = 0x4, fixed_abs, tag = 'smem constant byte address 0x4 - core index']
  #allocation1 [shape = 'u32[144,128]{1,0:T(1,128)}', space=vmem, size = 0x12000, scoped, tag = 'internal scratch']
  #allocation2 [shape = 'f32[1,128]{1,0:T(1,128)}', space=vmem, size = 0x200, scoped, tag = 'scratch operand']
  #allocation3 [shape = 'f32[1,128]{1,0:T(1,128)}', space=vmem, size = 0x200, scoped, tag = 'scratch operand']
  #allocation4 [shape = 'f32[1,128]{1,0:T(1,128)}', space=vmem, size = 0x200, scoped, tag = 'scratch operand']
  #allocation5 [shape = 'f32[1,128]{1,0:T(1,128)}', space=vmem, size = 0x200, scoped, tag = 'scratch operand']
  #allocation6 [shape = 'f32[1,128]{1,0:T(1,128)}', space=vmem, size = 0x200, scoped, tag = 'scratch operand']
  %s0 = inlined_call_operand.hbm [shape: f32[64,128], index: 0, kind: input, shape index: {}]
  %s1 = inlined_call_operand.hbm [shape: f32[64,128], index: 1, kind: input, shape index: {}]
  %s2 = inlined_call_operand.hbm [shape: f32[1,128], index: 2, kind: output, shape index: {}]
  %s3 = sld [smem:[#allocation0]]
  $region34: #{tpu_custom_call.1} parent=0
    _
  %s5 = ssub.s32 1, %s3
  %s6 = scalar_select 0, %s5, %s3
  $region1: #{tpu_custom_call.1} parent=0
    #allocation7 [shape = 'u8[32768]{0}', space=vmem, size = 0x8000, scoped, tag = 'input window, operand 0, single buffered']
    #allocation8 [shape = 's32[1]{0}', space=sflag, size = 0x4, scoped, tag = 'scoped memory for tpu_custom_call.1']
    #allocation9 [shape = 's32[1]{0}', space=sflag, size = 0x4, scoped, tag = 'scoped memory for tpu_custom_call.1']
    #allocation10 [shape = 'u8[32768]{0}', space=vmem, size = 0x8000, scoped, tag = 'input window, operand 1, single buffered']
    #allocation11 [shape = 's32[1]{0}', space=sflag, size = 0x4, scoped, tag = 'scoped memory for tpu_custom_call.1']
    #allocation12 [shape = 'u8[512]{0}', space=vmem, size = 0x400, scoped, tag = 'output window, operand 0, single buffered']
    %7 = vsyncpa [#allocation8], 0
    %8 = vsyncpa [#allocation11], 0
    %9 = vsyncpa [#allocation9], 0
    // Predicated region
    $region2: #{tpu_custom_call.1} parent=1 // pred_check
      _
    $region3: #{tpu_custom_call.1} parent=1 // pred_check_branch
      %11 = sbr.rel (0) target = $region5
    $region4: #{tpu_custom_call.1} parent=1 // pred_region
      %s13 = ssub.s32 1024, 1024
      %14 = vsyncadd [#allocation8], %s13
      %s15 = sshll.u32 [#allocation7], 4
      %s16 = int_to_ptr.vmem [resolvable:$true] %s15
      %21 = dma.hbm_to_vmem [thread:$0]  %s0, 1024, %s16, [#allocation8], 128, 128, 8
    $region5: #{tpu_custom_call.1} parent=1 // pred_fallthru
      _
    // Predicated region
    $region6: #{tpu_custom_call.1} parent=1 // pred_check
      _
    $region7: #{tpu_custom_call.1} parent=1 // pred_check_branch
      %23 = sbr.rel (0) target = $region9
    $region8: #{tpu_custom_call.1} parent=1 // pred_region
      %s25 = ssub.s32 1024, 1024
      %26 = vsyncadd [#allocation11], %s25
      %s27 = sshll.u32 [#allocation10], 4
      %s28 = int_to_ptr.vmem [resolvable:$true] %s27
      %33 = dma.hbm_to_vmem [thread:$0]  %s1, 1024, %s28, [#allocation11], 128, 128, 8
    $region9: #{tpu_custom_call.1} parent=1 // pred_fallthru
      _
    // Predicated region
    $region10: #{tpu_custom_call.1} parent=1 // pred_check
      _
    $region11: #{tpu_custom_call.1} parent=1 // pred_check_branch
      %35 = sbr.rel (0) target = $region13
    $region12: #{tpu_custom_call.1} parent=1 // pred_region
      %36 = dma.done [#allocation8], 1024
    $region13: #{tpu_custom_call.1} parent=1 // pred_fallthru
      _
    // Predicated region
    $region14: #{tpu_custom_call.1} parent=1 // pred_check
      _
    $region15: #{tpu_custom_call.1} parent=1 // pred_check_branch
      %38 = sbr.rel (0) target = $region17
    $region16: #{tpu_custom_call.1} parent=1 // pred_region
      %39 = dma.done [#allocation11], 1024
    $region17: #{tpu_custom_call.1} parent=1 // pred_fallthru
      _
    %p40 = scmp.eq.s32.totalorder 0, 0
    // Predicated region
    $region18: #{tpu_custom_call.1} parent=1 // pred_check
      %p41 = pneg %p40
    $region19: #{tpu_custom_call.1} parent=1 // pred_check_branch
      %43 = sbr.rel (%p41) target = $region21
    $region20: #{tpu_custom_call.1} parent=1 // pred_region
      %44 = vst [vmem:[#allocation2] sm:$0x1] 0.0
      %45 = vst [vmem:[#allocation3] sm:$0x1] 0.0
      %46 = vst [vmem:[#allocation4] sm:$0x1] 0.0
      %47 = vst [vmem:[#allocation5] sm:$0x1] 0.0
      %48 = vst [vmem:[#allocation6] sm:$0x1] 0.0
    $region21: #{tpu_custom_call.1} parent=1 // pred_fallthru
      _
    %v49 = vld [vmem:[#allocation7] sm:$0xff]
    %v50 = vld [vmem:[#allocation7 + $0x8] sm:$0xff]
    %v51 = vld [vmem:[#allocation7 + $0x10] sm:$0xff]
    %v52 = vld [vmem:[#allocation7 + $0x18] sm:$0xff]
    %v53 = vld [vmem:[#allocation7 + $0x20] sm:$0xff]
    %v54 = vld [vmem:[#allocation7 + $0x28] sm:$0xff]
    %v55 = vld [vmem:[#allocation7 + $0x30] sm:$0xff]
    %v56 = vld [vmem:[#allocation7 + $0x38] sm:$0xff]
    %v57 = vld [vmem:[#allocation10] sm:$0xff]
    %v58 = vld [vmem:[#allocation10 + $0x8] sm:$0xff]
    %v59 = vld [vmem:[#allocation10 + $0x10] sm:$0xff]
    %v60 = vld [vmem:[#allocation10 + $0x18] sm:$0xff]
    %v61 = vld [vmem:[#allocation10 + $0x20] sm:$0xff]
    %v62 = vld [vmem:[#allocation10 + $0x28] sm:$0xff]
    %v63 = vld [vmem:[#allocation10 + $0x30] sm:$0xff]
    %v64 = vld [vmem:[#allocation10 + $0x38] sm:$0xff]
    %v65 = vld [vmem:[#allocation2] sm:$0x1]
    %v66 = vadd.f32 %v49, %v50
    %v67 = vadd.f32 %v66, %v51
    %v68 = vadd.f32 %v67, %v52
    %v69 = vadd.f32 %v68, %v53
    %v70 = vadd.f32 %v69, %v54
    %v71 = vadd.f32 %v70, %v55
    %v72 = vadd.f32 %v71, %v56
    %v73 = vrot.slane %v72, 4
    %v74 = vadd.f32 %v72, %v73
    %v75 = vrot.slane %v74, 2
    %v76 = vadd.f32 %v74, %v75
    %v77 = vrot.slane %v76, 1
    %v78 = vadd.f32 %v76, %v77
    %v79 = vadd.f32 %v65, %v78
    %80 = vst [vmem:[#allocation2] sm:$0x1] %v79
    %v81 = vld [vmem:[#allocation3] sm:$0x1]
    %v82 = vadd.f32 %v57, %v58
    %v83 = vadd.f32 %v82, %v59
    %v84 = vadd.f32 %v83, %v60
    %v85 = vadd.f32 %v84, %v61
    %v86 = vadd.f32 %v85, %v62
    %v87 = vadd.f32 %v86, %v63
    %v88 = vadd.f32 %v87, %v64
    %v89 = vrot.slane %v88, 4
    %v90 = vadd.f32 %v88, %v89
    %v91 = vrot.slane %v90, 2
    %v92 = vadd.f32 %v90, %v91
    %v93 = vrot.slane %v92, 1
    %v94 = vadd.f32 %v92, %v93
    %v95 = vadd.f32 %v81, %v94
    %96 = vst [vmem:[#allocation3] sm:$0x1] %v95
    %v97 = vld [vmem:[#allocation4] sm:$0x1]
    %v98 = vmul.f32 %v49, %v49
    %v99 = vmul.f32 %v50, %v50
    %v100 = vmul.f32 %v51, %v51
    %v101 = vmul.f32 %v52, %v52
    %v102 = vmul.f32 %v53, %v53
    %v103 = vmul.f32 %v54, %v54
    %v104 = vmul.f32 %v55, %v55
    %v105 = vmul.f32 %v56, %v56
    %v106 = vadd.f32 %v98, %v99
    %v107 = vadd.f32 %v106, %v100
    %v108 = vadd.f32 %v107, %v101
    %v109 = vadd.f32 %v108, %v102
    %v110 = vadd.f32 %v109, %v103
    %v111 = vadd.f32 %v110, %v104
    %v112 = vadd.f32 %v111, %v105
    %v113 = vrot.slane %v112, 4
    %v114 = vadd.f32 %v112, %v113
    %v115 = vrot.slane %v114, 2
    %v116 = vadd.f32 %v114, %v115
    %v117 = vrot.slane %v116, 1
    %v118 = vadd.f32 %v116, %v117
    %v119 = vadd.f32 %v97, %v118
    %120 = vst [vmem:[#allocation4] sm:$0x1] %v119
    %v121 = vld [vmem:[#allocation5] sm:$0x1]
    %v122 = vmul.f32 %v57, %v57
    %v123 = vmul.f32 %v58, %v58
    %v124 = vmul.f32 %v59, %v59
    %v125 = vmul.f32 %v60, %v60
    %v126 = vmul.f32 %v61, %v61
    %v127 = vmul.f32 %v62, %v62
    %v128 = vmul.f32 %v63, %v63
    %v129 = vmul.f32 %v64, %v64
    %v130 = vadd.f32 %v122, %v123
    %v131 = vadd.f32 %v130, %v124
    %v132 = vadd.f32 %v131, %v125
    %v133 = vadd.f32 %v132, %v126
    %v134 = vadd.f32 %v133, %v127
    %v135 = vadd.f32 %v134, %v128
    %v136 = vadd.f32 %v135, %v129
    %v137 = vrot.slane %v136, 4
    %v138 = vadd.f32 %v136, %v137
    %v139 = vrot.slane %v138, 2
    %v140 = vadd.f32 %v138, %v139
    %v141 = vrot.slane %v140, 1
    %v142 = vadd.f32 %v140, %v141
    %v143 = vadd.f32 %v121, %v142
    %144 = vst [vmem:[#allocation5] sm:$0x1] %v143
    %v145 = vld [vmem:[#allocation6] sm:$0x1]
    %v146 = vmul.f32 %v49, %v57
    %v147 = vmul.f32 %v50, %v58
    %v148 = vmul.f32 %v51, %v59
    %v149 = vmul.f32 %v52, %v60
    %v150 = vmul.f32 %v53, %v61
    %v151 = vmul.f32 %v54, %v62
    %v152 = vmul.f32 %v55, %v63
    %v153 = vmul.f32 %v56, %v64
    %v154 = vadd.f32 %v146, %v147
    %v155 = vadd.f32 %v154, %v148
    %v156 = vadd.f32 %v155, %v149
    %v157 = vadd.f32 %v156, %v150
    %v158 = vadd.f32 %v157, %v151
    %v159 = vadd.f32 %v158, %v152
    %v160 = vadd.f32 %v159, %v153
    %v161 = vrot.slane %v160, 4
    %v162 = vadd.f32 %v160, %v161
    %v163 = vrot.slane %v162, 2
    %v164 = vadd.f32 %v162, %v163
    %v165 = vrot.slane %v164, 1
    %v166 = vadd.f32 %v164, %v165
    %v167 = vadd.f32 %v145, %v166
    %168 = vst [vmem:[#allocation6] sm:$0x1] %v167
    // Predicated region
    $region22: #{tpu_custom_call.1} parent=1 // pred_check
      %p169 = pneg %p40
    $region23: #{tpu_custom_call.1} parent=1 // pred_check_branch
      %171 = sbr.rel (%p169) target = $region25
    $region24: #{tpu_custom_call.1} parent=1 // pred_region
      %v172 = vld [vmem:[#allocation2] sm:$0x1]
      %vm173 = vcmask 1040384
      %v174 = vsel %vm173, %v172, 0.0
      %175 = vadd.xlane.f32.xlu0 %v174
      %v176 = vpop.xlane.xlu0 %175
      %v177 = vrot.slane %v176, 4
      %v178 = vadd.f32 %v176, %v177
      %v179 = vrot.slane %v178, 2
      %v180 = vadd.f32 %v178, %v179
      %v181 = vrot.slane %v180, 1
      %v182 = vadd.f32 %v180, %v181
      %s183 = vtos %v182
      %v184 = vld [vmem:[#allocation3] sm:$0x1]
      %v185 = vsel %vm173, %v184, 0.0
      %186 = vadd.xlane.f32.xlu0 %v185
      %v187 = vpop.xlane.xlu0 %186
      %v188 = vrot.slane %v187, 4
      %v189 = vadd.f32 %v187, %v188
      %v190 = vrot.slane %v189, 2
      %v191 = vadd.f32 %v189, %v190
      %v192 = vrot.slane %v191, 1
      %v193 = vadd.f32 %v191, %v192
      %s194 = vtos %v193
      %v195 = vld [vmem:[#allocation4] sm:$0x1]
      %v196 = vsel %vm173, %v195, 0.0
      %197 = vadd.xlane.f32.xlu0 %v196
      %v198 = vpop.xlane.xlu0 %197
      %v199 = vrot.slane %v198, 4
      %v200 = vadd.f32 %v198, %v199
      %v201 = vrot.slane %v200, 2
      %v202 = vadd.f32 %v200, %v201
      %v203 = vrot.slane %v202, 1
      %v204 = vadd.f32 %v202, %v203
      %s205 = vtos %v204
      %v206 = vld [vmem:[#allocation5] sm:$0x1]
      %v207 = vsel %vm173, %v206, 0.0
      %208 = vadd.xlane.f32.xlu0 %v207
      %v209 = vpop.xlane.xlu0 %208
      %v210 = vrot.slane %v209, 4
      %v211 = vadd.f32 %v209, %v210
      %v212 = vrot.slane %v211, 2
      %v213 = vadd.f32 %v211, %v212
      %v214 = vrot.slane %v213, 1
      %v215 = vadd.f32 %v213, %v214
      %s216 = vtos %v215
      %s217 = smul.f32 %s183, 0.00012207031
      %s218 = smul.f32 %s194, 0.00012207031
      %s219 = smul.f32 %s205, 0.00012207031
      %s220 = smul.f32 %s217, %s217
      %s221 = ssub.f32 %s219, %s220
      %s222 = smul.f32 %s216, 0.00012207031
      %s223 = smul.f32 %s218, %s218
      %s224 = ssub.f32 %s222, %s223
      %s225 = smul.f32 %s221, %s224
      %v226 = vstv %s225
      %v227 = vrsqrt.pop %v226
      %s228 = vtos %v227
      %v229 = vld [vmem:[#allocation6] sm:$0x1]
      %v230 = vstv %s217
      %v231 = vmul.f32 %v230, %v184
      %v232 = vsub.f32 %v229, %v231
      %v233 = vstv %s218
      %v234 = vmul.f32 %v233, %v172
      %v235 = vsub.f32 %v232, %v234
      %v236 = vmul.f32 %v235, 0.015625
      %s237 = smul.f32 %s217, %s218
      %v238 = vstv %s237
      %v239 = vadd.f32 %v236, %v238
      %v240 = vsub.f32 0.0, %v239
      %v241 = vstv %s228
      %v242 = vmul.f32 %v240, %v241
      %243 = vst [vmem:[#allocation12] sm:$0x1] %v242
    $region25: #{tpu_custom_call.1} parent=1 // pred_fallthru
      _
    // Predicated region
    $region26: #{tpu_custom_call.1} parent=1 // pred_check
      _
    $region27: #{tpu_custom_call.1} parent=1 // pred_check_branch
      %245 = sbr.rel (0) target = $region29
    $region28: #{tpu_custom_call.1} parent=1 // pred_region
      %s247 = ssub.s32 16, 16
      %248 = vsyncadd [#allocation9], %s247
      %s250 = sshll.u32 [#allocation12], 4
      %s251 = int_to_ptr.vmem [resolvable:$true] %s250
      %253 = dma.vmem_to_hbm [thread:$0]  %s251, 16, %s2, [#allocation9]
    $region29: #{tpu_custom_call.1} parent=1 // pred_fallthru
      _
    // Predicated region
    $region30: #{tpu_custom_call.1} parent=1 // pred_check
      _
    $region31: #{tpu_custom_call.1} parent=1 // pred_check_branch
      %255 = sbr.rel (0) target = $region33
    $region32: #{tpu_custom_call.1} parent=1 // pred_region
      %256 = dma.done [#allocation9], 16
    $region33: #{tpu_custom_call.1} parent=1 // pred_fallthru
      _
    %257 = vsyncpa [#allocation8], 1
    %258 = vsyncpa [#allocation11], 1
    %259 = vsyncpa [#allocation9], 1

</llo_original>
